<compile_context>
chip_gen: v7x
topology: tpu7x:2x2x1
jax: 0.10.0
libtpu: 0.0.40
codegen_flags: <defaults>
</compile_context>

<pallas_src>
import functools

import jax
import jax.numpy as jnp
from jax.experimental import pallas as pl
from jax.experimental.pallas import tpu as pltpu

_LANE = 128          # pad hidden/output feature dims to a full lane width
_SUBLANE_BF16 = 16   # bf16 sublane tile


def _round_up(n, m):
    return ((n + m - 1) // m) * m


def _cdiv(a, b):
    return -(-a // b)


def _qnet_kernel(x_ref, w1b1_ref, w2b2_ref, o_ref):
    """out = relu(x @ w1 + b1) @ w2 + b2 for one (TB, Dp) batch tile.

    x_ref  : (TB, Dp) f32  (feature dim zero-padded to Dp = round_up(D, 16))
    w1b1   : rows [0, Dp) = w1 (bf16, zero rows past D), row Dp = b1, rest zero.
             Shape (Dp + 16, Hp), Hp = round_up(H, 128).
    w2b2   : rows [0, Hp) = w2 (bf16, zero rows past H), row Hp = b2, rest zero.
             Shape (Hp + 16, Op), Op = round_up(O, 128).
    o_ref  : (TB, Op) bf16 — lane-dense unmasked store; real (B, O) sliced outside.
    Zero-padded lanes/rows stay zero through ReLU and contribute nothing.
    """
    Dp = x_ref.shape[1]
    Hp = w1b1_ref.shape[1]

    x = x_ref[...].astype(jnp.bfloat16)                  # f32->bf16 cast in-kernel
    w1 = w1b1_ref[:Dp, :]                                # (Dp, Hp) bf16, tile-aligned
    b1 = w1b1_ref[Dp:Dp + 1, :].astype(jnp.float32)      # (1, Hp) f32
    w2 = w2b2_ref[:Hp, :]                                # (Hp, Op) bf16, tile-aligned
    b2 = w2b2_ref[Hp:Hp + 1, :].astype(jnp.float32)      # (1, Op) f32

    # Layer 1: bf16 MXU matmul with f32 accumulation; bias + ReLU in f32 (VPU).
    h = jnp.dot(x, w1, preferred_element_type=jnp.float32) + b1
    h = jnp.maximum(h, 0.0)

    # Layer 2: hidden is padded to 128 lanes, so the bf16 intermediate is lane-dense.
    out = jnp.dot(h.astype(jnp.bfloat16), w2, preferred_element_type=jnp.float32) + b2
    o_ref[...] = out.astype(o_ref.dtype)                 # lane-dense bf16 store


def pack_params(w1, b1, w2, b2):
    """Pack (w1, b1, w2, b2) into two bf16, tile-aligned, lane-dense buffers."""
    D, H = w1.shape
    O = w2.shape[1]
    Dp = _round_up(D, _SUBLANE_BF16)
    Hp = _round_up(H, _LANE)
    Op = _round_up(O, _LANE)
    b1 = jnp.reshape(b1, (1, H))
    b2 = jnp.reshape(b2, (1, O))

    # w1 in rows [0, Dp) (rows D..Dp are zero), b1 at row Dp (a 16-row tile boundary).
    w1b1 = jnp.zeros((Dp + _SUBLANE_BF16, Hp), jnp.float32)
    w1b1 = w1b1.at[:D, :H].set(w1).at[Dp:Dp + 1, :H].set(b1)

    # w2 in rows [0, Hp) (rows H..Hp are zero), b2 at row Hp (tile boundary).
    w2b2 = jnp.zeros((Hp + _SUBLANE_BF16, Op), jnp.float32)
    w2b2 = w2b2.at[:H, :O].set(w2).at[Hp:Hp + 1, :O].set(b2)

    return w1b1.astype(jnp.bfloat16), w2b2.astype(jnp.bfloat16), Dp


def _choose_batch_tile(B, block_batch):
    """Largest tile (multiple of 16, <= block_batch) that still leaves >= 4 grid
    steps for large B (pipeline overlap + >=2 tiles per v7x TensorCore)."""
    Bp = _round_up(B, _SUBLANE_BF16)
    if Bp <= block_batch:
        return Bp
    n_tiles = max(4, _cdiv(Bp, block_batch))
    return _round_up(_cdiv(Bp, n_tiles), _SUBLANE_BF16)


@functools.partial(jax.jit, static_argnames=("input_pad", "out_features", "block_batch"))
def linear_qnet_forward(x, w1b1, w2b2, input_pad, out_features, block_batch=4096):
    """x: (B, D) f32. w1b1/w2b2: packed bf16 params from pack_params."""
    B, D = x.shape
    Op = w2b2.shape[1]

    TB = _choose_batch_tile(B, block_batch)
    B_pad = _round_up(B, TB)

    # Only zero-padding here (rows + feature lanes); the bf16 cast is in-kernel.
    x_p = jnp.pad(x, ((0, B_pad - B), (0, input_pad - D)))

    out = pl.pallas_call(
        _qnet_kernel,
        out_shape=jax.ShapeDtypeStruct((B_pad, Op), jnp.bfloat16),
        grid=(B_pad // TB,),
        in_specs=[
            pl.BlockSpec((TB, input_pad), lambda i: (i, 0)),  # batch-tiled activations
            pl.BlockSpec(w1b1.shape, lambda i: (0, 0)),       # weights VMEM-resident
            pl.BlockSpec(w2b2.shape, lambda i: (0, 0)),       # across grid iterations
        ],
        out_specs=pl.BlockSpec((TB, Op), lambda i: (i, 0)),   # lane-dense output slab
        compiler_params=pltpu.CompilerParams(
            dimension_semantics=("parallel",),                # batch axis is independent
        ),
    )(x_p, w1b1, w2b2)

    # Small copy: the padded bf16 slab stays in HBM; only (B, O) is sliced/cast.
    return out[:B, :out_features].astype(jnp.float32)


def _init_params(key, input_size, hidden_size, output_size):
    """Deterministic PyTorch-style uniform(-1/sqrt(fan_in), 1/sqrt(fan_in)) init."""
    k1, k2, k3, k4 = jax.random.split(key, 4)
    lim1 = 1.0 / jnp.sqrt(jnp.float32(input_size))
    lim2 = 1.0 / jnp.sqrt(jnp.float32(hidden_size))
    w1 = jax.random.uniform(k1, (input_size, hidden_size), jnp.float32, -lim1, lim1)
    b1 = jax.random.uniform(k2, (1, hidden_size), jnp.float32, -lim1, lim1)
    w2 = jax.random.uniform(k3, (hidden_size, output_size), jnp.float32, -lim2, lim2)
    b2 = jax.random.uniform(k4, (1, output_size), jnp.float32, -lim2, lim2)
    return w1, b1, w2, b2


if __name__ == "__main__":
    key = jax.random.PRNGKey(0)
    kx, kp = jax.random.split(key)

    # Small shapes consistent with Linear_QNet(input_size, hidden_size, output_size);
    # input_size=11 deliberately exercises the non-multiple-of-16 feature path.
    batch, input_size, hidden_size, output_size = 8, 11, 32, 3

    x = jax.random.normal(kx, (batch, input_size), jnp.float32)
    w1, b1, w2, b2 = _init_params(kp, input_size, hidden_size, output_size)

    # Pack once (weights-resident pattern), then run the kernel.
    w1b1, w2b2, input_pad = pack_params(w1, b1, w2, b2)
    out = linear_qnet_forward(x, w1b1, w2b2, input_pad, output_size)
    out = jax.block_until_ready(out)

    # Reference in plain f32 JAX (same math as the PyTorch forward).
    ref = jnp.maximum(x @ w1 + b1, 0.0) @ w2 + b2
    assert out.shape == (batch, output_size)
    # bf16 matmul inputs + bf16 output store with f32 accumulation -> ~1e-2 deviation.
    assert jnp.allclose(out, ref, atol=3e-2, rtol=3e-2), float(jnp.max(jnp.abs(out - ref)))

    print("KERNEL_OK")
</pallas_src>

<mosaic_0001>
module attributes {stable_mosaic.version = 11 : i64} {
  func.func @_qnet_kernel(%arg0: i32, %arg1: memref<16x16xf32, #tpu.memory_space<vmem>>, %arg2: memref<32x128xbf16, #tpu.memory_space<vmem>>, %arg3: memref<144x128xbf16, #tpu.memory_space<vmem>>, %arg4: memref<16x128xbf16, #tpu.memory_space<vmem>>) attributes {dimension_semantics = [#tpu.dimension_semantics<parallel>], iteration_bounds = array<i64: 1>, scalar_prefetch = 0 : i64, scratch_operands = 0 : i64, tpu.core_type = #tpu.core_type<tc>, window_params = [{transform_indices = @transform_0, window_bounds = array<i64: 16, 16>}, {pipeline_mode = #tpu.pipeline_mode<synchronous>, transform_indices = @transform_1, window_bounds = array<i64: 32, 128>}, {pipeline_mode = #tpu.pipeline_mode<synchronous>, transform_indices = @transform_2, window_bounds = array<i64: 144, 128>}, {transform_indices = @transform_3, window_bounds = array<i64: 16, 128>}]} {
    %c0 = arith.constant 0 : index
    %c0_0 = arith.constant 0 : index
    %0 = vector.load %arg1[%c0, %c0_0] : memref<16x16xf32, #tpu.memory_space<vmem>>, vector<16x16xf32>
    %1 = arith.truncf %0 : vector<16x16xf32> to vector<16x16xbf16>
    %c0_1 = arith.constant 0 : index
    %c0_2 = arith.constant 0 : index
    %2 = vector.load %arg2[%c0_1, %c0_2] : memref<32x128xbf16, #tpu.memory_space<vmem>>, vector<16x128xbf16>
    %c16 = arith.constant 16 : index
    %c0_3 = arith.constant 0 : index
    %3 = vector.load %arg2[%c16, %c0_3] : memref<32x128xbf16, #tpu.memory_space<vmem>>, vector<1x128xbf16>
    %4 = arith.extf %3 : vector<1x128xbf16> to vector<1x128xf32>
    %c0_4 = arith.constant 0 : index
    %c0_5 = arith.constant 0 : index
    %5 = vector.load %arg3[%c0_4, %c0_5] : memref<144x128xbf16, #tpu.memory_space<vmem>>, vector<128x128xbf16>
    %c128 = arith.constant 128 : index
    %c0_6 = arith.constant 0 : index
    %6 = vector.load %arg3[%c128, %c0_6] : memref<144x128xbf16, #tpu.memory_space<vmem>>, vector<1x128xbf16>
    %7 = arith.extf %6 : vector<1x128xbf16> to vector<1x128xf32>
    %cst = arith.constant dense<0.000000e+00> : vector<16x128xf32>
    %8 = tpu.matmul %1, %2, %cst {dimension_numbers = #tpu.dot_dimension_numbers<[1], [0], [0], [1], [0, 0, 1, 1], [], []>} : vector<16x16xbf16>, vector<16x128xbf16>, vector<16x128xf32> -> vector<16x128xf32>
    %9 = vector.broadcast %4 : vector<1x128xf32> to vector<16x128xf32>
    %10 = arith.addf %8, %9 : vector<16x128xf32>
    %cst_7 = arith.constant 0.000000e+00 : f32
    %11 = vector.broadcast %cst_7 : f32 to vector<16x128xf32>
    %12 = arith.maximumf %10, %11 : vector<16x128xf32>
    %13 = arith.truncf %12 : vector<16x128xf32> to vector<16x128xbf16>
    %cst_8 = arith.constant dense<0.000000e+00> : vector<16x128xf32>
    %14 = tpu.matmul %13, %5, %cst_8 {dimension_numbers = #tpu.dot_dimension_numbers<[1], [0], [0], [1], [0, 0, 1, 1], [], []>} : vector<16x128xbf16>, vector<128x128xbf16>, vector<16x128xf32> -> vector<16x128xf32>
    %15 = vector.broadcast %7 : vector<1x128xf32> to vector<16x128xf32>
    %16 = arith.addf %14, %15 : vector<16x128xf32>
    %17 = arith.truncf %16 : vector<16x128xf32> to vector<16x128xbf16>
    %c0_9 = arith.constant 0 : index
    %c0_10 = arith.constant 0 : index
    %18 = vector.load %arg4[%c0_9, %c0_10] : memref<16x128xbf16, #tpu.memory_space<vmem>>, vector<16x128xbf16>
    tpu.vector_store %arg4[%c0_9, %c0_10], %17 {strides = array<i32>} : memref<16x128xbf16, #tpu.memory_space<vmem>>, vector<16x128xbf16>,
    return
  }
  func.func @transform_0(%arg0: i32) -> (i32, i32) {
    %c0_i32 = arith.constant 0 : i32
    %c0_i32_0 = arith.constant 0 : i32
    return %arg0, %c0_i32 : i32, i32
  }
  func.func @transform_1(%arg0: i32) -> (i32, i32) {
    %c0_i32 = arith.constant 0 : i32
    %c0_i32_0 = arith.constant 0 : i32
    %c0_i32_1 = arith.constant 0 : i32
    return %c0_i32, %c0_i32_0 : i32, i32
  }
  func.func @transform_2(%arg0: i32) -> (i32, i32) {
    %c0_i32 = arith.constant 0 : i32
    %c0_i32_0 = arith.constant 0 : i32
    %c0_i32_1 = arith.constant 0 : i32
    return %c0_i32, %c0_i32_0 : i32, i32
  }
  func.func @transform_3(%arg0: i32) -> (i32, i32) {
    %c0_i32 = arith.constant 0 : i32
    %c0_i32_0 = arith.constant 0 : i32
    return %arg0, %c0_i32 : i32, i32
  }
}

</mosaic_0001>

<llo_original>
// kernel: linear_qnet_forward.1
$region0: #{linear_qnet_forward.1}
  #allocation0 [shape = 'u32[]', space=smem, size = 0x4, offset = 0x4, fixed_abs, tag = 'smem constant byte address 0x4 - core index']
  #allocation1 [shape = 'u32[144,128]{1,0:T(1,128)}', space=vmem, size = 0x12000, scoped, tag = 'internal scratch']
  %s0 = inlined_call_operand.vmem [shape: f32[16,16], index: 0, kind: input, shape index: {}]
  %s1 = inlined_call_operand.vmem [shape: bf16[32,128], index: 1, kind: input, shape index: {}]
  %s2 = inlined_call_operand.hbm [shape: bf16[144,128], index: 2, kind: input, shape index: {}]
  %s3 = inlined_call_operand.vmem [shape: bf16[16,128], index: 3, kind: output, shape index: {}]
  %s4 = sld [smem:[#allocation0]]
  $region26: #{linear_qnet_forward.1} parent=0
    _
  %s6 = ssub.s32 1, %s4
  %s7 = scalar_select 0, %s6, %s4
  $region1: #{linear_qnet_forward.1} parent=0
    #allocation2 [shape = 'u8[36864]{0}', space=vmem, size = 0x9000, scoped, tag = 'input window, operand 2, single buffered']
    #allocation3 [shape = 's32[1]{0}', space=sflag, size = 0x4, scoped, tag = 'scoped memory for linear_qnet_forward.1']
    %8 = vsyncpa [#allocation3], 0
    // Predicated region
    $region2: #{linear_qnet_forward.1} parent=1 // pred_check
      _
    $region3: #{linear_qnet_forward.1} parent=1 // pred_check_branch
      %10 = sbr.rel (0) target = $region5
    $region4: #{linear_qnet_forward.1} parent=1 // pred_region
      _
    $region5: #{linear_qnet_forward.1} parent=1 // pred_fallthru
      _
    // Predicated region
    $region6: #{linear_qnet_forward.1} parent=1 // pred_check
      _
    $region7: #{linear_qnet_forward.1} parent=1 // pred_check_branch
      %12 = sbr.rel (0) target = $region9
    $region8: #{linear_qnet_forward.1} parent=1 // pred_region
      _
    $region9: #{linear_qnet_forward.1} parent=1 // pred_fallthru
      _
    // Predicated region
    $region10: #{linear_qnet_forward.1} parent=1 // pred_check
      _
    $region11: #{linear_qnet_forward.1} parent=1 // pred_check_branch
      %14 = sbr.rel (0) target = $region13
    $region12: #{linear_qnet_forward.1} parent=1 // pred_region
      %s16 = ssub.s32 1152, 1152
      %17 = vsyncadd [#allocation3], %s16
      %s18 = sshll.u32 [#allocation2], 4
      %s19 = int_to_ptr.vmem [resolvable:$true] %s18
      %24 = dma.hbm_to_vmem [thread:$0]  %s2, 1152, %s19, [#allocation3], 64, 64, 4
    $region13: #{linear_qnet_forward.1} parent=1 // pred_fallthru
      _
    // Predicated region
    $region14: #{linear_qnet_forward.1} parent=1 // pred_check
      _
    $region15: #{linear_qnet_forward.1} parent=1 // pred_check_branch
      %26 = sbr.rel (0) target = $region17
    $region16: #{linear_qnet_forward.1} parent=1 // pred_region
      %27 = dma.done [#allocation3], 1152
    $region17: #{linear_qnet_forward.1} parent=1 // pred_fallthru
      _
    %v29 = vld [vmem:[%s0] sm:$0xff]
    %v30 = vld [vmem:[%s0 + $0x8] sm:$0xff]
    %v31 = vpack.c.bf16 %v30, %v29
    %v32 = vld [vmem:[%s1] sm:$0xf]
    %v33 = vld [vmem:[%s1 + $0x4] sm:$0xf]
    %v34 = vld [vmem:[%s1 + $0x8] sm:$0x1]
    %v35 = vunpack.c.l.bf16 %v34
    %v36 = vld [vmem:[#allocation2] sm:$0xf]
    %v37 = vld [vmem:[#allocation2 + $0x4] sm:$0xf]
    %v38 = vld [vmem:[#allocation2 + $0x8] sm:$0xf]
    %v39 = vld [vmem:[#allocation2 + $0xc] sm:$0xf]
    %v40 = vld [vmem:[#allocation2 + $0x10] sm:$0xf]
    %v41 = vld [vmem:[#allocation2 + $0x14] sm:$0xf]
    %v42 = vld [vmem:[#allocation2 + $0x18] sm:$0xf]
    %v43 = vld [vmem:[#allocation2 + $0x1c] sm:$0xf]
    %v44 = vld [vmem:[#allocation2 + $0x20] sm:$0xf]
    %v45 = vld [vmem:[#allocation2 + $0x24] sm:$0xf]
    %v46 = vld [vmem:[#allocation2 + $0x28] sm:$0xf]
    %v47 = vld [vmem:[#allocation2 + $0x2c] sm:$0xf]
    %v48 = vld [vmem:[#allocation2 + $0x30] sm:$0xf]
    %v49 = vld [vmem:[#allocation2 + $0x34] sm:$0xf]
    %v50 = vld [vmem:[#allocation2 + $0x38] sm:$0xf]
    %v51 = vld [vmem:[#allocation2 + $0x3c] sm:$0xf]
    %v52 = vld [vmem:[#allocation2 + $0x40] sm:$0x1]
    %v53 = vunpack.c.l.bf16 %v52
    %v54 = vlaneseq
    %v55 = vshrl.u32 %v54, 7
    %v56 = vsub.s32 0, %v55
    %v57 = vrot.slane %v35, %v56
    %v60 = vunpack.c.l.b16 %v32
    %v61 = vunpack.c.l.b16 %v33
    %v62 = vpack.c.b16 %v61, %v60
    %vm64 = vcmask 130048
    %v66 = vsel %vm64, %v31, 0
    %68 = vmatprep.subr.bf16.mxu0 0
    %69 = vmatpush1.bf16.msra.mxu0 %v62
    %70 = vmatprep.subr.bf16.mxu0 0
    %71 = vmatpush1.bf16.msra.mxu0 0
    %72 = vmatprep.subr.bf16.mxu0 0
    %73 = vmatpush1.bf16.msra.mxu0 0
    %74 = vmatprep.subr.bf16.mxu0 0
    %75 = vmatpush1.bf16.msra.mxu0 0
    %76 = vmatprep.subr.bf16.mxu0 0
    %77 = vmatpush1.bf16.msra.mxu0 0
    %78 = vmatprep.subr.bf16.mxu0 0
    %79 = vmatpush1.bf16.msra.mxu0 0
    %80 = vmatprep.subr.bf16.mxu0 0
    %81 = vmatpush1.bf16.msra.mxu0 0
    %82 = vmatprep.subr.bf16.mxu0 0
    %83 = vmatpush1.bf16.msra.mxu0 0
    %84 = vmatprep.subr.bf16.mxu0 0
    %85 = vmatpush1.bf16.msra.mxu0 0
    %86 = vmatprep.subr.bf16.mxu0 0
    %87 = vmatpush1.bf16.msra.mxu0 0
    %88 = vmatprep.subr.bf16.mxu0 0
    %89 = vmatpush1.bf16.msra.mxu0 0
    %90 = vmatprep.subr.bf16.mxu0 0
    %91 = vmatpush1.bf16.msra.mxu0 0
    %92 = vmatprep.subr.bf16.mxu0 0
    %93 = vmatpush1.bf16.msra.mxu0 0
    %94 = vmatprep.subr.bf16.mxu0 0
    %95 = vmatpush1.bf16.msra.mxu0 0
    %96 = vmatprep.subr.bf16.mxu0 0
    %97 = vmatpush1.bf16.msra.mxu0 0
    %98 = vmatprep.subr.bf16.mxu0 0
    %99 = vmatpush1.bf16.msra.mxu0 0
    %100 = vmatprep.mubr.bf16.mxu0 0
    %101 = vmatmul.mubr.bf16.gmra.mrb[0].mxu0 %v66
    %v102 = vpop.f32.mrb[0].mxu0
    %v103 = vadd.f32 %v57, %v102
    %v104 = vpop.f32.mrb[0].mxu0
    %v105 = vpop.f32.mrb[0].mxu0
    %v106 = vadd.f32 %v57, %v105
    %v107 = vpop.f32.mrb[0].mxu0
    %108 = vdwg.mxu0
    %v109 = vmax.f32 %v103, 0.0
    %v110 = vmax.f32 %v106, 0.0
    %v111 = vpack.c.bf16 %v110, %v109
    %v112 = vlaneseq
    %v113 = vshrl.u32 %v112, 7
    %v114 = vsub.s32 0, %v113
    %v115 = vrot.slane %v53, %v114
    %v132 = vunpack.c.l.b16 %v36
    %v133 = vunpack.c.l.b16 %v37
    %v134 = vunpack.c.l.b16 %v38
    %v135 = vunpack.c.l.b16 %v39
    %v136 = vunpack.c.l.b16 %v40
    %v137 = vunpack.c.l.b16 %v41
    %v138 = vunpack.c.l.b16 %v42
    %v139 = vunpack.c.l.b16 %v43
    %v140 = vunpack.c.l.b16 %v44
    %v141 = vunpack.c.l.b16 %v45
    %v142 = vunpack.c.l.b16 %v46
    %v143 = vunpack.c.l.b16 %v47
    %v144 = vunpack.c.l.b16 %v48
    %v145 = vunpack.c.l.b16 %v49
    %v146 = vunpack.c.l.b16 %v50
    %v147 = vunpack.c.l.b16 %v51
    %v148 = vpack.c.b16 %v133, %v132
    %v149 = vpack.c.b16 %v135, %v134
    %v150 = vpack.c.b16 %v137, %v136
    %v151 = vpack.c.b16 %v139, %v138
    %v152 = vpack.c.b16 %v141, %v140
    %v153 = vpack.c.b16 %v143, %v142
    %v154 = vpack.c.b16 %v145, %v144
    %v155 = vpack.c.b16 %v147, %v146
    %164 = vmatprep.subr.bf16.mxu0 0
    %165 = vmatpush1.bf16.msra.mxu0 %v148
    %166 = vmatprep.subr.bf16.mxu0 0
    %167 = vmatpush1.bf16.msra.mxu0 %v149
    %168 = vmatprep.subr.bf16.mxu0 0
    %169 = vmatpush1.bf16.msra.mxu0 %v150
    %170 = vmatprep.subr.bf16.mxu0 0
    %171 = vmatpush1.bf16.msra.mxu0 %v151
    %172 = vmatprep.subr.bf16.mxu0 0
    %173 = vmatpush1.bf16.msra.mxu0 %v152
    %174 = vmatprep.subr.bf16.mxu0 0
    %175 = vmatpush1.bf16.msra.mxu0 %v153
    %176 = vmatprep.subr.bf16.mxu0 0
    %177 = vmatpush1.bf16.msra.mxu0 %v154
    %178 = vmatprep.subr.bf16.mxu0 0
    %179 = vmatpush1.bf16.msra.mxu0 %v155
    %180 = vmatprep.subr.bf16.mxu0 0
    %181 = vmatpush1.bf16.msra.mxu0 0
    %182 = vmatprep.subr.bf16.mxu0 0
    %183 = vmatpush1.bf16.msra.mxu0 0
    %184 = vmatprep.subr.bf16.mxu0 0
    %185 = vmatpush1.bf16.msra.mxu0 0
    %186 = vmatprep.subr.bf16.mxu0 0
    %187 = vmatpush1.bf16.msra.mxu0 0
    %188 = vmatprep.subr.bf16.mxu0 0
    %189 = vmatpush1.bf16.msra.mxu0 0
    %190 = vmatprep.subr.bf16.mxu0 0
    %191 = vmatpush1.bf16.msra.mxu0 0
    %192 = vmatprep.subr.bf16.mxu0 0
    %193 = vmatpush1.bf16.msra.mxu0 0
    %194 = vmatprep.subr.bf16.mxu0 0
    %195 = vmatpush1.bf16.msra.mxu0 0
    %196 = vmatprep.mubr.bf16.mxu0 0
    %197 = vmatmul.mubr.bf16.gmra.mrb[0].mxu0 %v111
    %v198 = vpop.f32.mrb[0].mxu0
    %v199 = vadd.f32 %v115, %v198
    %v200 = vpop.f32.mrb[0].mxu0
    %v201 = vpop.f32.mrb[0].mxu0
    %v202 = vadd.f32 %v115, %v201
    %v203 = vpop.f32.mrb[0].mxu0
    %204 = vdwg.mxu0
    %v205 = vpack.c.bf16 %v202, %v199
    %v207 = vunpack.c.l.b16 %v205
    %v208 = vunpack.c.h.b16 %v205
    %v209 = vpack.c.b16 %v207, %v207
    %v210 = vpack.c.b16 %v208, %v208
    %213 = vst [vmem:[%s3] sm:$0xf] %v209
    %214 = vst [vmem:[%s3 + $0x4] sm:$0xf] %v210
    // Predicated region
    $region18: #{linear_qnet_forward.1} parent=1 // pred_check
      _
    $region19: #{linear_qnet_forward.1} parent=1 // pred_check_branch
      %216 = sbr.rel (0) target = $region21
    $region20: #{linear_qnet_forward.1} parent=1 // pred_region
      _
    $region21: #{linear_qnet_forward.1} parent=1 // pred_fallthru
      _
    // Predicated region
    $region22: #{linear_qnet_forward.1} parent=1 // pred_check
      _
    $region23: #{linear_qnet_forward.1} parent=1 // pred_check_branch
      %218 = sbr.rel (0) target = $region25
    $region24: #{linear_qnet_forward.1} parent=1 // pred_region
      _
    $region25: #{linear_qnet_forward.1} parent=1 // pred_fallthru
      _
    %219 = vsyncpa [#allocation3], 1

</llo_original>
